<compile_context>
chip_gen: v7x
topology: tpu7x:2x2x1
jax: 0.10.0
libtpu: 0.0.40
codegen_flags: <defaults>
</compile_context>

<pallas_src>
import functools

import jax
import jax.numpy as jnp
from jax.experimental import pallas as pl
from jax.experimental.pallas import tpu as pltpu

BN_EPS = 1e-5
SUBLANE = 8


def _round_up(x, m):
    return ((x + m - 1) // m) * m


# ------------------------------ fused kernels ------------------------------- #

def _vgg_pooled_kernel(x_ref, wr_ref, wfc_ref, bn_ref, we_ref, o_ref, hid_ref,
                       *, n_valid, cin, chid, hw, training):
    """ch_reduce (1x1) -> fc (full-spatial conv) -> BN -> ch_expand (1x1).

    x_ref   : (Np, Cin, HW)    f32 VMEM  (natural NCHW flatten, no transpose)
    wr_ref  : (Cin, Chid)      f32 SMEM  (1x1 reduce weight, scalar access)
    wfc_ref : (Chid*HW, Chid)  f32 VMEM  (fc weight pre-flattened, long-K)
    bn_ref  : (4, Chid)        f32 VMEM  (gamma / beta / run_mean / run_var)
    we_ref  : (Chid, Cout)     f32 VMEM  (1x1 expand weight)
    o_ref   : (Np, Cout)       f32 VMEM
    hid_ref : (Np, Chid*HW)    f32 VMEM scratch (reduce output == fc lhs)
    """
    # --- ch_reduce on the VPU (Cin x Chid is tiny; avoids MXU zero padding).
    xs = [x_ref[:, c, :] for c in range(cin)]                 # Cin x (Np, HW)
    for h in range(chid):
        acc = xs[0] * wr_ref[0, h]
        for c in range(1, cin):
            acc = acc + xs[c] * wr_ref[c, h]
        hid_ref[:, h * hw:(h + 1) * hw] = acc                 # columns (h, k)

    # --- fc conv == one long-K matmul: (Np, Chid*HW) @ (Chid*HW, Chid).
    y = jnp.dot(hid_ref[...], wfc_ref[...], preferred_element_type=jnp.float32)

    # --- BatchNorm in f32 (spatial is 1x1 after the fc conv).
    gamma, beta = bn_ref[0:1, :], bn_ref[1:2, :]
    if training:
        yv = y[:n_valid]                                      # drop padded rows
        mu = jnp.mean(yv, axis=0, keepdims=True)
        var = jnp.mean((yv - mu) ** 2, axis=0, keepdims=True)
    else:
        mu, var = bn_ref[2:3, :], bn_ref[3:4, :]
    yn = gamma * (y - mu) * jax.lax.rsqrt(var + BN_EPS) + beta

    # --- ch_expand (1x1 conv on the 1x1 spatial map) -> flatten == (Np, Cout).
    o_ref[...] = jnp.dot(yn, we_ref[...], preferred_element_type=jnp.float32)
    # TODO(synk): PyTorch training-mode BN also updates running_mean/var in
    # place; that buffer mutation does not affect the forward output and is
    # not reproduced here.


def _vgg_nopool_kernel(x_ref, wfc_ref, bn_ref, o_ref, *, n_valid, training):
    """fc (full-spatial conv) -> BN (no pooling branch).

    x_ref: (Np, Cin*HW) f32; wfc_ref: (Cin*HW, Cin); bn_ref: (4, Cin).
    """
    y = jnp.dot(x_ref[...], wfc_ref[...], preferred_element_type=jnp.float32)
    gamma, beta = bn_ref[0:1, :], bn_ref[1:2, :]
    if training:
        yv = y[:n_valid]
        mu = jnp.mean(yv, axis=0, keepdims=True)
        var = jnp.mean((yv - mu) ** 2, axis=0, keepdims=True)
    else:
        mu, var = bn_ref[2:3, :], bn_ref[3:4, :]
    o_ref[...] = gamma * (y - mu) * jax.lax.rsqrt(var + BN_EPS) + beta


# --------------------------- params & preparation --------------------------- #

def init_vgg_params(key, in_ch, size, pool_channel=None):
    """Deterministic synthetic parameters with the exact shapes of VGG.__init__."""
    ks = jax.random.split(key, 5)
    params = {}
    if pool_channel:
        hidden = pool_channel
        params["w_reduce"] = 0.10 * jax.random.normal(ks[0], (hidden, in_ch, 1, 1), jnp.float32)
        params["w_fc"] = 0.05 * jax.random.normal(ks[1], (hidden, hidden, size, size), jnp.float32)
        params["w_expand"] = 0.10 * jax.random.normal(ks[2], (in_ch, hidden, 1, 1), jnp.float32)
        bn_ch = hidden
    else:
        params["w_fc"] = 0.05 * jax.random.normal(ks[1], (in_ch, in_ch, size, size), jnp.float32)
        bn_ch = in_ch
    params["bn_gamma"] = 1.0 + 0.1 * jax.random.normal(ks[3], (bn_ch,), jnp.float32)
    params["bn_beta"] = 0.1 * jax.random.normal(ks[4], (bn_ch,), jnp.float32)
    params["bn_mean"] = jnp.zeros((bn_ch,), jnp.float32)
    params["bn_var"] = jnp.ones((bn_ch,), jnp.float32)
    return params


def prepare_vgg_params(params, *, in_ch, size, pool_channel=None):
    """One-time weight relayout so the forward path does zero per-call relayout.
    No channel padding, no bf16 cast (f32 throughout per review)."""
    prep = {}
    if pool_channel:
        hidden = pool_channel
        prep["w_reduce"] = params["w_reduce"].reshape(hidden, in_ch).T       # (Cin, Chid)
        prep["w_fc"] = params["w_fc"].reshape(hidden, -1).T                  # (Chid*HW, Chid)
        prep["w_expand"] = params["w_expand"].reshape(in_ch, hidden).T       # (Chid, Cout)
    else:
        prep["w_fc"] = params["w_fc"].reshape(in_ch, -1).T                   # (Cin*HW, Cin)
    prep["bn"] = jnp.stack([params["bn_gamma"], params["bn_beta"],
                            params["bn_mean"], params["bn_var"]],
                           axis=0).astype(jnp.float32)                       # (4, C)
    return prep


# --------------------------------- forward ---------------------------------- #

def vgg_forward(x, prep, *, pool_channel=None, bn_training=True):
    """x: (N, C, H, W) NCHW float32, H == W == size.  Returns (N, C_out) like
    torch.flatten(out, start_dim=1) (spatial is 1x1 after the fc conv)."""
    N, C, H, W = x.shape
    hw = H * W
    pooled = bool(pool_channel)
    n_p = _round_up(N, SUBLANE)                  # sublane-align the batch rows
    cout = C

    if pooled:
        chid = pool_channel
        x_in = x.reshape(N, C, hw).astype(jnp.float32)       # pure reshape, no transpose
        if n_p != N:
            x_in = jnp.pad(x_in, ((0, n_p - N), (0, 0), (0, 0)))
        kern = functools.partial(_vgg_pooled_kernel, n_valid=N, cin=C,
                                 chid=chid, hw=hw, training=bn_training)
        inputs = (x_in, prep["w_reduce"], prep["w_fc"], prep["bn"], prep["w_expand"])
        in_specs = [
            pl.BlockSpec(memory_space=pltpu.MemorySpace.VMEM),   # x
            pl.BlockSpec(memory_space=pltpu.MemorySpace.SMEM),   # w_reduce (scalars)
            pl.BlockSpec(memory_space=pltpu.MemorySpace.VMEM),   # w_fc
            pl.BlockSpec(memory_space=pltpu.MemorySpace.VMEM),   # bn pack
            pl.BlockSpec(memory_space=pltpu.MemorySpace.VMEM),   # w_expand
        ]
        scratch = [pltpu.VMEM((n_p, chid * hw), jnp.float32)]
        flops = (2 * n_p * hw * C * chid            # ch_reduce
                 + 2 * n_p * (chid * hw) * chid     # fc (long-K matmul)
                 + 2 * n_p * chid * cout)           # ch_expand
    else:
        x_in = x.reshape(N, C * hw).astype(jnp.float32)
        if n_p != N:
            x_in = jnp.pad(x_in, ((0, n_p - N), (0, 0)))
        kern = functools.partial(_vgg_nopool_kernel, n_valid=N, training=bn_training)
        inputs = (x_in, prep["w_fc"], prep["bn"])
        in_specs = [pl.BlockSpec(memory_space=pltpu.MemorySpace.VMEM)] * 3
        scratch = []
        flops = 2 * n_p * (C * hw) * C

    bytes_accessed = sum(int(a.size) * a.dtype.itemsize for a in inputs) + n_p * cout * 4

    out = pl.pallas_call(
        kern,
        out_shape=jax.ShapeDtypeStruct((n_p, cout), jnp.float32),
        in_specs=in_specs,
        out_specs=pl.BlockSpec(memory_space=pltpu.MemorySpace.VMEM),
        scratch_shapes=scratch,
        cost_estimate=pl.CostEstimate(flops=int(flops), transcendentals=0,
                                      bytes_accessed=int(bytes_accessed)),
    )(*inputs)
    return out[:N]


# ------------------------ pure-JAX reference (check) ------------------------ #

def vgg_reference(x, params, *, size, pool_channel=None, bn_training=True):
    conv = functools.partial(jax.lax.conv_general_dilated,
                             window_strides=(1, 1), padding="VALID",
                             dimension_numbers=("NCHW", "OIHW", "NCHW"),
                             precision=jax.lax.Precision.HIGHEST)
    h = x
    if pool_channel:
        h = conv(h, params["w_reduce"])
    y = conv(h, params["w_fc"])                                  # (N, C, 1, 1)
    if bn_training:
        mu = jnp.mean(y, axis=(0, 2, 3), keepdims=True)
        var = jnp.mean((y - mu) ** 2, axis=(0, 2, 3), keepdims=True)
    else:
        mu = params["bn_mean"].reshape(1, -1, 1, 1)
        var = params["bn_var"].reshape(1, -1, 1, 1)
    y = (params["bn_gamma"].reshape(1, -1, 1, 1) * (y - mu)
         * jax.lax.rsqrt(var + BN_EPS) + params["bn_beta"].reshape(1, -1, 1, 1))
    if pool_channel:
        y = conv(y, params["w_expand"])
    return y.reshape(y.shape[0], -1)


# ----------------------------------- main ----------------------------------- #

if __name__ == "__main__":
    N, in_ch, size, pool_channel = 8, 8, 8, 4

    key = jax.random.PRNGKey(0)
    kx, kp = jax.random.split(key)
    x = jax.random.normal(kx, (N, in_ch, size, size), jnp.float32)

    # pooled branch (ch_reduce -> fc+BN -> ch_expand), training-mode BN
    params = init_vgg_params(kp, in_ch, size, pool_channel)
    prep = prepare_vgg_params(params, in_ch=in_ch, size=size, pool_channel=pool_channel)
    out = jax.block_until_ready(
        vgg_forward(x, prep, pool_channel=pool_channel, bn_training=True))
    assert out.shape == (N, in_ch), out.shape
    ref = vgg_reference(x, params, size=size, pool_channel=pool_channel, bn_training=True)
    assert jnp.allclose(out, ref, rtol=2e-2, atol=2e-2), \
        f"pooled/train max abs err {jnp.max(jnp.abs(out - ref))}"

    # pooled branch, eval-mode BN (running stats are used)
    out_e = jax.block_until_ready(
        vgg_forward(x, prep, pool_channel=pool_channel, bn_training=False))
    ref_e = vgg_reference(x, params, size=size, pool_channel=pool_channel, bn_training=False)
    assert jnp.allclose(out_e, ref_e, rtol=2e-2, atol=2e-2), \
        f"pooled/eval max abs err {jnp.max(jnp.abs(out_e - ref_e))}"

    # no-pool branch (fc+BN only)
    params2 = init_vgg_params(kp, in_ch, size, None)
    prep2 = prepare_vgg_params(params2, in_ch=in_ch, size=size, pool_channel=None)
    out2 = jax.block_until_ready(
        vgg_forward(x, prep2, pool_channel=None, bn_training=True))
    assert out2.shape == (N, in_ch), out2.shape
    ref2 = vgg_reference(x, params2, size=size, pool_channel=None, bn_training=True)
    assert jnp.allclose(out2, ref2, rtol=2e-2, atol=2e-2), \
        f"nopool/train max abs err {jnp.max(jnp.abs(out2 - ref2))}"

    print("KERNEL_OK")
</pallas_src>

<mosaic_0001>
module attributes {stable_mosaic.version = 11 : i64} {
  func.func @_vgg_pooled_kernel(%arg0: memref<8x8x64xf32, #tpu.memory_space<vmem>>, %arg1: memref<8x4xf32, #tpu.memory_space<smem>>, %arg2: memref<256x4xf32, #tpu.memory_space<vmem>>, %arg3: memref<4x4xf32, #tpu.memory_space<vmem>>, %arg4: memref<4x8xf32, #tpu.memory_space<vmem>>, %arg5: memref<8x8xf32, #tpu.memory_space<vmem>>, %arg6: memref<8x256xf32, #tpu.memory_space<vmem>>) attributes {dimension_semantics = [], scalar_prefetch = 0 : i64, scratch_operands = 1 : i64, tpu.core_type = #tpu.core_type<tc>} {
    %c0 = arith.constant 0 : index
    %c0_0 = arith.constant 0 : index
    %c0_1 = arith.constant 0 : index
    %0 = vector.load %arg0[%c0, %c0_0, %c0_1] : memref<8x8x64xf32, #tpu.memory_space<vmem>>, vector<8x1x64xf32>
    %1 = vector.shape_cast %0 : vector<8x1x64xf32> to vector<8x64xf32>
    %c0_2 = arith.constant 0 : index
    %c1 = arith.constant 1 : index
    %c0_3 = arith.constant 0 : index
    %2 = vector.load %arg0[%c0_2, %c1, %c0_3] : memref<8x8x64xf32, #tpu.memory_space<vmem>>, vector<8x1x64xf32>
    %3 = vector.shape_cast %2 : vector<8x1x64xf32> to vector<8x64xf32>
    %c0_4 = arith.constant 0 : index
    %c2 = arith.constant 2 : index
    %c0_5 = arith.constant 0 : index
    %4 = vector.load %arg0[%c0_4, %c2, %c0_5] : memref<8x8x64xf32, #tpu.memory_space<vmem>>, vector<8x1x64xf32>
    %5 = vector.shape_cast %4 : vector<8x1x64xf32> to vector<8x64xf32>
    %c0_6 = arith.constant 0 : index
    %c3 = arith.constant 3 : index
    %c0_7 = arith.constant 0 : index
    %6 = vector.load %arg0[%c0_6, %c3, %c0_7] : memref<8x8x64xf32, #tpu.memory_space<vmem>>, vector<8x1x64xf32>
    %7 = vector.shape_cast %6 : vector<8x1x64xf32> to vector<8x64xf32>
    %c0_8 = arith.constant 0 : index
    %c4 = arith.constant 4 : index
    %c0_9 = arith.constant 0 : index
    %8 = vector.load %arg0[%c0_8, %c4, %c0_9] : memref<8x8x64xf32, #tpu.memory_space<vmem>>, vector<8x1x64xf32>
    %9 = vector.shape_cast %8 : vector<8x1x64xf32> to vector<8x64xf32>
    %c0_10 = arith.constant 0 : index
    %c5 = arith.constant 5 : index
    %c0_11 = arith.constant 0 : index
    %10 = vector.load %arg0[%c0_10, %c5, %c0_11] : memref<8x8x64xf32, #tpu.memory_space<vmem>>, vector<8x1x64xf32>
    %11 = vector.shape_cast %10 : vector<8x1x64xf32> to vector<8x64xf32>
    %c0_12 = arith.constant 0 : index
    %c6 = arith.constant 6 : index
    %c0_13 = arith.constant 0 : index
    %12 = vector.load %arg0[%c0_12, %c6, %c0_13] : memref<8x8x64xf32, #tpu.memory_space<vmem>>, vector<8x1x64xf32>
    %13 = vector.shape_cast %12 : vector<8x1x64xf32> to vector<8x64xf32>
    %c0_14 = arith.constant 0 : index
    %c7 = arith.constant 7 : index
    %c0_15 = arith.constant 0 : index
    %14 = vector.load %arg0[%c0_14, %c7, %c0_15] : memref<8x8x64xf32, #tpu.memory_space<vmem>>, vector<8x1x64xf32>
    %15 = vector.shape_cast %14 : vector<8x1x64xf32> to vector<8x64xf32>
    %c0_16 = arith.constant 0 : index
    %c0_17 = arith.constant 0 : index
    %16 = memref.load %arg1[%c0_16, %c0_17] : memref<8x4xf32, #tpu.memory_space<smem>>
    %17 = vector.broadcast %16 : f32 to vector<8x64xf32>
    %18 = arith.mulf %1, %17 : vector<8x64xf32>
    %c1_18 = arith.constant 1 : index
    %c0_19 = arith.constant 0 : index
    %19 = memref.load %arg1[%c1_18, %c0_19] : memref<8x4xf32, #tpu.memory_space<smem>>
    %20 = vector.broadcast %19 : f32 to vector<8x64xf32>
    %21 = arith.mulf %3, %20 : vector<8x64xf32>
    %22 = arith.addf %18, %21 : vector<8x64xf32>
    %c2_20 = arith.constant 2 : index
    %c0_21 = arith.constant 0 : index
    %23 = memref.load %arg1[%c2_20, %c0_21] : memref<8x4xf32, #tpu.memory_space<smem>>
    %24 = vector.broadcast %23 : f32 to vector<8x64xf32>
    %25 = arith.mulf %5, %24 : vector<8x64xf32>
    %26 = arith.addf %22, %25 : vector<8x64xf32>
    %c3_22 = arith.constant 3 : index
    %c0_23 = arith.constant 0 : index
    %27 = memref.load %arg1[%c3_22, %c0_23] : memref<8x4xf32, #tpu.memory_space<smem>>
    %28 = vector.broadcast %27 : f32 to vector<8x64xf32>
    %29 = arith.mulf %7, %28 : vector<8x64xf32>
    %30 = arith.addf %26, %29 : vector<8x64xf32>
    %c4_24 = arith.constant 4 : index
    %c0_25 = arith.constant 0 : index
    %31 = memref.load %arg1[%c4_24, %c0_25] : memref<8x4xf32, #tpu.memory_space<smem>>
    %32 = vector.broadcast %31 : f32 to vector<8x64xf32>
    %33 = arith.mulf %9, %32 : vector<8x64xf32>
    %34 = arith.addf %30, %33 : vector<8x64xf32>
    %c5_26 = arith.constant 5 : index
    %c0_27 = arith.constant 0 : index
    %35 = memref.load %arg1[%c5_26, %c0_27] : memref<8x4xf32, #tpu.memory_space<smem>>
    %36 = vector.broadcast %35 : f32 to vector<8x64xf32>
    %37 = arith.mulf %11, %36 : vector<8x64xf32>
    %38 = arith.addf %34, %37 : vector<8x64xf32>
    %c6_28 = arith.constant 6 : index
    %c0_29 = arith.constant 0 : index
    %39 = memref.load %arg1[%c6_28, %c0_29] : memref<8x4xf32, #tpu.memory_space<smem>>
    %40 = vector.broadcast %39 : f32 to vector<8x64xf32>
    %41 = arith.mulf %13, %40 : vector<8x64xf32>
    %42 = arith.addf %38, %41 : vector<8x64xf32>
    %c7_30 = arith.constant 7 : index
    %c0_31 = arith.constant 0 : index
    %43 = memref.load %arg1[%c7_30, %c0_31] : memref<8x4xf32, #tpu.memory_space<smem>>
    %44 = vector.broadcast %43 : f32 to vector<8x64xf32>
    %45 = arith.mulf %15, %44 : vector<8x64xf32>
    %46 = arith.addf %42, %45 : vector<8x64xf32>
    %c0_32 = arith.constant 0 : index
    %c0_33 = arith.constant 0 : index
    %47 = vector.load %arg6[%c0_32, %c0_33] : memref<8x256xf32, #tpu.memory_space<vmem>>, vector<8x64xf32>
    tpu.vector_store %arg6[%c0_32, %c0_33], %46 {strides = array<i32>} : memref<8x256xf32, #tpu.memory_space<vmem>>, vector<8x64xf32>,
    %c0_34 = arith.constant 0 : index
    %c1_35 = arith.constant 1 : index
    %48 = memref.load %arg1[%c0_34, %c1_35] : memref<8x4xf32, #tpu.memory_space<smem>>
    %49 = vector.broadcast %48 : f32 to vector<8x64xf32>
    %50 = arith.mulf %1, %49 : vector<8x64xf32>
    %c1_36 = arith.constant 1 : index
    %c1_37 = arith.constant 1 : index
    %51 = memref.load %arg1[%c1_36, %c1_37] : memref<8x4xf32, #tpu.memory_space<smem>>
    %52 = vector.broadcast %51 : f32 to vector<8x64xf32>
    %53 = arith.mulf %3, %52 : vector<8x64xf32>
    %54 = arith.addf %50, %53 : vector<8x64xf32>
    %c2_38 = arith.constant 2 : index
    %c1_39 = arith.constant 1 : index
    %55 = memref.load %arg1[%c2_38, %c1_39] : memref<8x4xf32, #tpu.memory_space<smem>>
    %56 = vector.broadcast %55 : f32 to vector<8x64xf32>
    %57 = arith.mulf %5, %56 : vector<8x64xf32>
    %58 = arith.addf %54, %57 : vector<8x64xf32>
    %c3_40 = arith.constant 3 : index
    %c1_41 = arith.constant 1 : index
    %59 = memref.load %arg1[%c3_40, %c1_41] : memref<8x4xf32, #tpu.memory_space<smem>>
    %60 = vector.broadcast %59 : f32 to vector<8x64xf32>
    %61 = arith.mulf %7, %60 : vector<8x64xf32>
    %62 = arith.addf %58, %61 : vector<8x64xf32>
    %c4_42 = arith.constant 4 : index
    %c1_43 = arith.constant 1 : index
    %63 = memref.load %arg1[%c4_42, %c1_43] : memref<8x4xf32, #tpu.memory_space<smem>>
    %64 = vector.broadcast %63 : f32 to vector<8x64xf32>
    %65 = arith.mulf %9, %64 : vector<8x64xf32>
    %66 = arith.addf %62, %65 : vector<8x64xf32>
    %c5_44 = arith.constant 5 : index
    %c1_45 = arith.constant 1 : index
    %67 = memref.load %arg1[%c5_44, %c1_45] : memref<8x4xf32, #tpu.memory_space<smem>>
    %68 = vector.broadcast %67 : f32 to vector<8x64xf32>
    %69 = arith.mulf %11, %68 : vector<8x64xf32>
    %70 = arith.addf %66, %69 : vector<8x64xf32>
    %c6_46 = arith.constant 6 : index
    %c1_47 = arith.constant 1 : index
    %71 = memref.load %arg1[%c6_46, %c1_47] : memref<8x4xf32, #tpu.memory_space<smem>>
    %72 = vector.broadcast %71 : f32 to vector<8x64xf32>
    %73 = arith.mulf %13, %72 : vector<8x64xf32>
    %74 = arith.addf %70, %73 : vector<8x64xf32>
    %c7_48 = arith.constant 7 : index
    %c1_49 = arith.constant 1 : index
    %75 = memref.load %arg1[%c7_48, %c1_49] : memref<8x4xf32, #tpu.memory_space<smem>>
    %76 = vector.broadcast %75 : f32 to vector<8x64xf32>
    %77 = arith.mulf %15, %76 : vector<8x64xf32>
    %78 = arith.addf %74, %77 : vector<8x64xf32>
    %c0_50 = arith.constant 0 : index
    %c64 = arith.constant 64 : index
    %79 = vector.load %arg6[%c0_50, %c64] : memref<8x256xf32, #tpu.memory_space<vmem>>, vector<8x64xf32>
    tpu.vector_store %arg6[%c0_50, %c64], %78 {strides = array<i32>} : memref<8x256xf32, #tpu.memory_space<vmem>>, vector<8x64xf32>,
    %c0_51 = arith.constant 0 : index
    %c2_52 = arith.constant 2 : index
    %80 = memref.load %arg1[%c0_51, %c2_52] : memref<8x4xf32, #tpu.memory_space<smem>>
    %81 = vector.broadcast %80 : f32 to vector<8x64xf32>
    %82 = arith.mulf %1, %81 : vector<8x64xf32>
    %c1_53 = arith.constant 1 : index
    %c2_54 = arith.constant 2 : index
    %83 = memref.load %arg1[%c1_53, %c2_54] : memref<8x4xf32, #tpu.memory_space<smem>>
    %84 = vector.broadcast %83 : f32 to vector<8x64xf32>
    %85 = arith.mulf %3, %84 : vector<8x64xf32>
    %86 = arith.addf %82, %85 : vector<8x64xf32>
    %c2_55 = arith.constant 2 : index
    %c2_56 = arith.constant 2 : index
    %87 = memref.load %arg1[%c2_55, %c2_56] : memref<8x4xf32, #tpu.memory_space<smem>>
    %88 = vector.broadcast %87 : f32 to vector<8x64xf32>
    %89 = arith.mulf %5, %88 : vector<8x64xf32>
    %90 = arith.addf %86, %89 : vector<8x64xf32>
    %c3_57 = arith.constant 3 : index
    %c2_58 = arith.constant 2 : index
    %91 = memref.load %arg1[%c3_57, %c2_58] : memref<8x4xf32, #tpu.memory_space<smem>>
    %92 = vector.broadcast %91 : f32 to vector<8x64xf32>
    %93 = arith.mulf %7, %92 : vector<8x64xf32>
    %94 = arith.addf %90, %93 : vector<8x64xf32>
    %c4_59 = arith.constant 4 : index
    %c2_60 = arith.constant 2 : index
    %95 = memref.load %arg1[%c4_59, %c2_60] : memref<8x4xf32, #tpu.memory_space<smem>>
    %96 = vector.broadcast %95 : f32 to vector<8x64xf32>
    %97 = arith.mulf %9, %96 : vector<8x64xf32>
    %98 = arith.addf %94, %97 : vector<8x64xf32>
    %c5_61 = arith.constant 5 : index
    %c2_62 = arith.constant 2 : index
    %99 = memref.load %arg1[%c5_61, %c2_62] : memref<8x4xf32, #tpu.memory_space<smem>>
    %100 = vector.broadcast %99 : f32 to vector<8x64xf32>
    %101 = arith.mulf %11, %100 : vector<8x64xf32>
    %102 = arith.addf %98, %101 : vector<8x64xf32>
    %c6_63 = arith.constant 6 : index
    %c2_64 = arith.constant 2 : index
    %103 = memref.load %arg1[%c6_63, %c2_64] : memref<8x4xf32, #tpu.memory_space<smem>>
    %104 = vector.broadcast %103 : f32 to vector<8x64xf32>
    %105 = arith.mulf %13, %104 : vector<8x64xf32>
    %106 = arith.addf %102, %105 : vector<8x64xf32>
    %c7_65 = arith.constant 7 : index
    %c2_66 = arith.constant 2 : index
    %107 = memref.load %arg1[%c7_65, %c2_66] : memref<8x4xf32, #tpu.memory_space<smem>>
    %108 = vector.broadcast %107 : f32 to vector<8x64xf32>
    %109 = arith.mulf %15, %108 : vector<8x64xf32>
    %110 = arith.addf %106, %109 : vector<8x64xf32>
    %c0_67 = arith.constant 0 : index
    %c128 = arith.constant 128 : index
    %111 = vector.load %arg6[%c0_67, %c128] : memref<8x256xf32, #tpu.memory_space<vmem>>, vector<8x64xf32>
    tpu.vector_store %arg6[%c0_67, %c128], %110 {strides = array<i32>} : memref<8x256xf32, #tpu.memory_space<vmem>>, vector<8x64xf32>,
    %c0_68 = arith.constant 0 : index
    %c3_69 = arith.constant 3 : index
    %112 = memref.load %arg1[%c0_68, %c3_69] : memref<8x4xf32, #tpu.memory_space<smem>>
    %113 = vector.broadcast %112 : f32 to vector<8x64xf32>
    %114 = arith.mulf %1, %113 : vector<8x64xf32>
    %c1_70 = arith.constant 1 : index
    %c3_71 = arith.constant 3 : index
    %115 = memref.load %arg1[%c1_70, %c3_71] : memref<8x4xf32, #tpu.memory_space<smem>>
    %116 = vector.broadcast %115 : f32 to vector<8x64xf32>
    %117 = arith.mulf %3, %116 : vector<8x64xf32>
    %118 = arith.addf %114, %117 : vector<8x64xf32>
    %c2_72 = arith.constant 2 : index
    %c3_73 = arith.constant 3 : index
    %119 = memref.load %arg1[%c2_72, %c3_73] : memref<8x4xf32, #tpu.memory_space<smem>>
    %120 = vector.broadcast %119 : f32 to vector<8x64xf32>
    %121 = arith.mulf %5, %120 : vector<8x64xf32>
    %122 = arith.addf %118, %121 : vector<8x64xf32>
    %c3_74 = arith.constant 3 : index
    %c3_75 = arith.constant 3 : index
    %123 = memref.load %arg1[%c3_74, %c3_75] : memref<8x4xf32, #tpu.memory_space<smem>>
    %124 = vector.broadcast %123 : f32 to vector<8x64xf32>
    %125 = arith.mulf %7, %124 : vector<8x64xf32>
    %126 = arith.addf %122, %125 : vector<8x64xf32>
    %c4_76 = arith.constant 4 : index
    %c3_77 = arith.constant 3 : index
    %127 = memref.load %arg1[%c4_76, %c3_77] : memref<8x4xf32, #tpu.memory_space<smem>>
    %128 = vector.broadcast %127 : f32 to vector<8x64xf32>
    %129 = arith.mulf %9, %128 : vector<8x64xf32>
    %130 = arith.addf %126, %129 : vector<8x64xf32>
    %c5_78 = arith.constant 5 : index
    %c3_79 = arith.constant 3 : index
    %131 = memref.load %arg1[%c5_78, %c3_79] : memref<8x4xf32, #tpu.memory_space<smem>>
    %132 = vector.broadcast %131 : f32 to vector<8x64xf32>
    %133 = arith.mulf %11, %132 : vector<8x64xf32>
    %134 = arith.addf %130, %133 : vector<8x64xf32>
    %c6_80 = arith.constant 6 : index
    %c3_81 = arith.constant 3 : index
    %135 = memref.load %arg1[%c6_80, %c3_81] : memref<8x4xf32, #tpu.memory_space<smem>>
    %136 = vector.broadcast %135 : f32 to vector<8x64xf32>
    %137 = arith.mulf %13, %136 : vector<8x64xf32>
    %138 = arith.addf %134, %137 : vector<8x64xf32>
    %c7_82 = arith.constant 7 : index
    %c3_83 = arith.constant 3 : index
    %139 = memref.load %arg1[%c7_82, %c3_83] : memref<8x4xf32, #tpu.memory_space<smem>>
    %140 = vector.broadcast %139 : f32 to vector<8x64xf32>
    %141 = arith.mulf %15, %140 : vector<8x64xf32>
    %142 = arith.addf %138, %141 : vector<8x64xf32>
    %c0_84 = arith.constant 0 : index
    %c192 = arith.constant 192 : index
    %143 = vector.load %arg6[%c0_84, %c192] : memref<8x256xf32, #tpu.memory_space<vmem>>, vector<8x64xf32>
    tpu.vector_store %arg6[%c0_84, %c192], %142 {strides = array<i32>} : memref<8x256xf32, #tpu.memory_space<vmem>>, vector<8x64xf32>,
    %c0_85 = arith.constant 0 : index
    %c0_86 = arith.constant 0 : index
    %144 = vector.load %arg6[%c0_85, %c0_86] : memref<8x256xf32, #tpu.memory_space<vmem>>, vector<8x256xf32>
    %c0_87 = arith.constant 0 : index
    %c0_88 = arith.constant 0 : index
    %145 = vector.load %arg2[%c0_87, %c0_88] : memref<256x4xf32, #tpu.memory_space<vmem>>, vector<256x4xf32>
    %cst = arith.constant dense<0.000000e+00> : vector<8x4xf32>
    %146 = tpu.matmul %144, %145, %cst {dimension_numbers = #tpu.dot_dimension_numbers<[1], [0], [0], [1], [0, 0, 1, 1], [], []>} : vector<8x256xf32>, vector<256x4xf32>, vector<8x4xf32> -> vector<8x4xf32>
    %c0_89 = arith.constant 0 : index
    %c0_90 = arith.constant 0 : index
    %147 = vector.load %arg3[%c0_89, %c0_90] : memref<4x4xf32, #tpu.memory_space<vmem>>, vector<1x4xf32>
    %c1_91 = arith.constant 1 : index
    %c0_92 = arith.constant 0 : index
    %148 = vector.load %arg3[%c1_91, %c0_92] : memref<4x4xf32, #tpu.memory_space<vmem>>, vector<1x4xf32>
    %cst_93 = arith.constant dense<0.000000e+00> : vector<4xf32>
    %149 = vector.multi_reduction <add>, %146, %cst_93 [0] : vector<8x4xf32> to vector<4xf32>
    %150 = vector.shape_cast %149 : vector<4xf32> to vector<1x4xf32>
    %cst_94 = arith.constant 8.000000e+00 : f32
    %151 = vector.broadcast %cst_94 : f32 to vector<1x4xf32>
    %152 = arith.divf %150, %151 : vector<1x4xf32>
    %153 = vector.broadcast %152 : vector<1x4xf32> to vector<8x4xf32>
    %154 = arith.subf %146, %153 : vector<8x4xf32>
    %155 = arith.mulf %154, %154 : vector<8x4xf32>
    %cst_95 = arith.constant dense<0.000000e+00> : vector<4xf32>
    %156 = vector.multi_reduction <add>, %155, %cst_95 [0] : vector<8x4xf32> to vector<4xf32>
    %157 = vector.shape_cast %156 : vector<4xf32> to vector<1x4xf32>
    %cst_96 = arith.constant 8.000000e+00 : f32
    %158 = vector.broadcast %cst_96 : f32 to vector<1x4xf32>
    %159 = arith.divf %157, %158 : vector<1x4xf32>
    %160 = vector.broadcast %152 : vector<1x4xf32> to vector<8x4xf32>
    %161 = arith.subf %146, %160 : vector<8x4xf32>
    %162 = vector.broadcast %147 : vector<1x4xf32> to vector<8x4xf32>
    %163 = arith.mulf %162, %161 : vector<8x4xf32>
    %cst_97 = arith.constant 9.99999974E-6 : f32
    %164 = vector.broadcast %cst_97 : f32 to vector<1x4xf32>
    %165 = arith.addf %159, %164 : vector<1x4xf32>
    %166 = math.rsqrt %165 : vector<1x4xf32>
    %167 = vector.broadcast %166 : vector<1x4xf32> to vector<8x4xf32>
    %168 = arith.mulf %163, %167 : vector<8x4xf32>
    %169 = vector.broadcast %148 : vector<1x4xf32> to vector<8x4xf32>
    %170 = arith.addf %168, %169 : vector<8x4xf32>
    %c0_98 = arith.constant 0 : index
    %c0_99 = arith.constant 0 : index
    %171 = vector.load %arg4[%c0_98, %c0_99] : memref<4x8xf32, #tpu.memory_space<vmem>>, vector<4x8xf32>
    %cst_100 = arith.constant dense<0.000000e+00> : vector<8x8xf32>
    %172 = tpu.matmul %170, %171, %cst_100 {dimension_numbers = #tpu.dot_dimension_numbers<[1], [0], [0], [1], [0, 0, 1, 1], [], []>} : vector<8x4xf32>, vector<4x8xf32>, vector<8x8xf32> -> vector<8x8xf32>
    %c0_101 = arith.constant 0 : index
    %c0_102 = arith.constant 0 : index
    %173 = vector.load %arg5[%c0_101, %c0_102] : memref<8x8xf32, #tpu.memory_space<vmem>>, vector<8x8xf32>
    tpu.vector_store %arg5[%c0_101, %c0_102], %172 {strides = array<i32>} : memref<8x8xf32, #tpu.memory_space<vmem>>, vector<8x8xf32>,
    return
  }
}

</mosaic_0001>

<llo_original>
// kernel: tpu_custom_call.1
$region0: #{tpu_custom_call.1}
  #allocation0 [shape = 'u32[]', space=smem, size = 0x4, offset = 0x4, fixed_abs, tag = 'smem constant byte address 0x4 - core index']
  #allocation1 [shape = 'u32[144,128]{1,0:T(1,128)}', space=vmem, size = 0x12000, scoped, tag = 'internal scratch']
  #allocation2 [shape = 'f32[8,256]{1,0:T(8,128)}', space=vmem, size = 0x2000, scoped, tag = 'scratch operand']
  %s0 = inlined_call_operand.vmem [shape: f32[8,8,64], index: 0, kind: input, shape index: {}]
  %s1 = inlined_call_operand.vmem [shape: f32[8,4], index: 1, kind: input, shape index: {}]
  %s2 = inlined_call_operand.vmem [shape: f32[256,4], index: 2, kind: input, shape index: {}]
  %s3 = inlined_call_operand.vmem [shape: f32[4,4], index: 3, kind: input, shape index: {}]
  %s4 = inlined_call_operand.vmem [shape: f32[4,8], index: 4, kind: input, shape index: {}]
  %s5 = inlined_call_operand.hbm [shape: f32[8,8], index: 5, kind: output, shape index: {}]
  %s6 = sld [smem:[#allocation0]]
  $region34: #{tpu_custom_call.1} parent=0
    _
  %s8 = ssub.s32 1, %s6
  %s9 = scalar_select 0, %s8, %s6
  $region1: #{tpu_custom_call.1} parent=0
    #allocation3 [shape = 'u8[4096]{0}', space=smem, size = 0x1000, scoped, tag = 'input window, operand 1, single buffered']
    #allocation4 [shape = 's32[1]{0}', space=sflag, size = 0x4, scoped, tag = 'scoped memory for tpu_custom_call.1']
    #allocation5 [shape = 's32[1]{0}', space=sflag, size = 0x4, scoped, tag = 'scoped memory for tpu_custom_call.1']
    #allocation6 [shape = 'u8[4096]{0}', space=vmem, size = 0x1000, scoped, tag = 'output window, operand 0, single buffered']
    %10 = vsyncpa [#allocation5], 0
    %11 = vsyncpa [#allocation4], 0
    // Predicated region
    $region2: #{tpu_custom_call.1} parent=1 // pred_check
      _
    $region3: #{tpu_custom_call.1} parent=1 // pred_check_branch
      %13 = sbr.rel (0) target = $region5
    $region4: #{tpu_custom_call.1} parent=1 // pred_region
      _
    $region5: #{tpu_custom_call.1} parent=1 // pred_fallthru
      _
    // Predicated region
    $region6: #{tpu_custom_call.1} parent=1 // pred_check
      _
    $region7: #{tpu_custom_call.1} parent=1 // pred_check_branch
      %15 = sbr.rel (0) target = $region9
    $region8: #{tpu_custom_call.1} parent=1 // pred_region
      %s17 = ssub.s32 128, 128
      %18 = vsyncadd [#allocation5], %s17
      %s20 = sshll.u32 %s1, 4
      %s21 = int_to_ptr.vmem [resolvable:$true] %s20
      %23 = dma.vmem_to_smem %s21, 128, [#allocation3], [#allocation5]
    $region9: #{tpu_custom_call.1} parent=1 // pred_fallthru
      _
    // Predicated region
    $region10: #{tpu_custom_call.1} parent=1 // pred_check
      _
    $region11: #{tpu_custom_call.1} parent=1 // pred_check_branch
      %25 = sbr.rel (0) target = $region13
    $region12: #{tpu_custom_call.1} parent=1 // pred_region
      _
    $region13: #{tpu_custom_call.1} parent=1 // pred_fallthru
      _
    // Predicated region
    $region14: #{tpu_custom_call.1} parent=1 // pred_check
      _
    $region15: #{tpu_custom_call.1} parent=1 // pred_check_branch
      %27 = sbr.rel (0) target = $region17
    $region16: #{tpu_custom_call.1} parent=1 // pred_region
      _
    $region17: #{tpu_custom_call.1} parent=1 // pred_fallthru
      _
    // Predicated region
    $region18: #{tpu_custom_call.1} parent=1 // pred_check
      _
    $region19: #{tpu_custom_call.1} parent=1 // pred_check_branch
      %29 = sbr.rel (0) target = $region21
    $region20: #{tpu_custom_call.1} parent=1 // pred_region
      _
    $region21: #{tpu_custom_call.1} parent=1 // pred_fallthru
      _
    // Predicated region
    $region22: #{tpu_custom_call.1} parent=1 // pred_check
      _
    $region23: #{tpu_custom_call.1} parent=1 // pred_check_branch
      %31 = sbr.rel (0) target = $region25
    $region24: #{tpu_custom_call.1} parent=1 // pred_region
      %32 = dma.done [#allocation5], 128
    $region25: #{tpu_custom_call.1} parent=1 // pred_fallthru
      _
    %33 = sfence
    %v34 = vld [vmem:[%s0] sm:$0x1]
    %v35 = vld [vmem:[%s0 + $0x8] sm:$0x1]
    %v36 = vld [vmem:[%s0 + $0x10] sm:$0x1]
    %v37 = vld [vmem:[%s0 + $0x18] sm:$0x1]
    %v38 = vld [vmem:[%s0 + $0x20] sm:$0x1]
    %v39 = vld [vmem:[%s0 + $0x28] sm:$0x1]
    %v40 = vld [vmem:[%s0 + $0x30] sm:$0x1]
    %v41 = vld [vmem:[%s0 + $0x38] sm:$0x1]
    %v42 = vld [vmem:[%s0 + $0x1] sm:$0x1]
    %v43 = vld [vmem:[%s0 + $0x9] sm:$0x1]
    %v44 = vld [vmem:[%s0 + $0x11] sm:$0x1]
    %v45 = vld [vmem:[%s0 + $0x19] sm:$0x1]
    %v46 = vld [vmem:[%s0 + $0x21] sm:$0x1]
    %v47 = vld [vmem:[%s0 + $0x29] sm:$0x1]
    %v48 = vld [vmem:[%s0 + $0x31] sm:$0x1]
    %v49 = vld [vmem:[%s0 + $0x39] sm:$0x1]
    %v50 = vld [vmem:[%s0 + $0x2] sm:$0x1]
    %v51 = vld [vmem:[%s0 + $0xa] sm:$0x1]
    %v52 = vld [vmem:[%s0 + $0x12] sm:$0x1]
    %v53 = vld [vmem:[%s0 + $0x1a] sm:$0x1]
    %v54 = vld [vmem:[%s0 + $0x22] sm:$0x1]
    %v55 = vld [vmem:[%s0 + $0x2a] sm:$0x1]
    %v56 = vld [vmem:[%s0 + $0x32] sm:$0x1]
    %v57 = vld [vmem:[%s0 + $0x3a] sm:$0x1]
    %v58 = vld [vmem:[%s0 + $0x3] sm:$0x1]
    %v59 = vld [vmem:[%s0 + $0xb] sm:$0x1]
    %v60 = vld [vmem:[%s0 + $0x13] sm:$0x1]
    %v61 = vld [vmem:[%s0 + $0x1b] sm:$0x1]
    %v62 = vld [vmem:[%s0 + $0x23] sm:$0x1]
    %v63 = vld [vmem:[%s0 + $0x2b] sm:$0x1]
    %v64 = vld [vmem:[%s0 + $0x33] sm:$0x1]
    %v65 = vld [vmem:[%s0 + $0x3b] sm:$0x1]
    %v66 = vld [vmem:[%s0 + $0x4] sm:$0x1]
    %v67 = vld [vmem:[%s0 + $0xc] sm:$0x1]
    %v68 = vld [vmem:[%s0 + $0x14] sm:$0x1]
    %v69 = vld [vmem:[%s0 + $0x1c] sm:$0x1]
    %v70 = vld [vmem:[%s0 + $0x24] sm:$0x1]
    %v71 = vld [vmem:[%s0 + $0x2c] sm:$0x1]
    %v72 = vld [vmem:[%s0 + $0x34] sm:$0x1]
    %v73 = vld [vmem:[%s0 + $0x3c] sm:$0x1]
    %v74 = vld [vmem:[%s0 + $0x5] sm:$0x1]
    %v75 = vld [vmem:[%s0 + $0xd] sm:$0x1]
    %v76 = vld [vmem:[%s0 + $0x15] sm:$0x1]
    %v77 = vld [vmem:[%s0 + $0x1d] sm:$0x1]
    %v78 = vld [vmem:[%s0 + $0x25] sm:$0x1]
    %v79 = vld [vmem:[%s0 + $0x2d] sm:$0x1]
    %v80 = vld [vmem:[%s0 + $0x35] sm:$0x1]
    %v81 = vld [vmem:[%s0 + $0x3d] sm:$0x1]
    %v82 = vld [vmem:[%s0 + $0x6] sm:$0x1]
    %v83 = vld [vmem:[%s0 + $0xe] sm:$0x1]
    %v84 = vld [vmem:[%s0 + $0x16] sm:$0x1]
    %v85 = vld [vmem:[%s0 + $0x1e] sm:$0x1]
    %v86 = vld [vmem:[%s0 + $0x26] sm:$0x1]
    %v87 = vld [vmem:[%s0 + $0x2e] sm:$0x1]
    %v88 = vld [vmem:[%s0 + $0x36] sm:$0x1]
    %v89 = vld [vmem:[%s0 + $0x3e] sm:$0x1]
    %v90 = vld [vmem:[%s0 + $0x7] sm:$0x1]
    %v91 = vld [vmem:[%s0 + $0xf] sm:$0x1]
    %v92 = vld [vmem:[%s0 + $0x17] sm:$0x1]
    %v93 = vld [vmem:[%s0 + $0x1f] sm:$0x1]
    %v94 = vld [vmem:[%s0 + $0x27] sm:$0x1]
    %v95 = vld [vmem:[%s0 + $0x2f] sm:$0x1]
    %v96 = vld [vmem:[%s0 + $0x37] sm:$0x1]
    %v97 = vld [vmem:[%s0 + $0x3f] sm:$0x1]
    %s98 = sld [smem:[#allocation3]]
    %v99 = vstv %s98
    %v100 = vmul.f32 %v34, %v99
    %v101 = vmul.f32 %v35, %v99
    %v102 = vmul.f32 %v36, %v99
    %v103 = vmul.f32 %v37, %v99
    %v104 = vmul.f32 %v38, %v99
    %v105 = vmul.f32 %v39, %v99
    %v106 = vmul.f32 %v40, %v99
    %v107 = vmul.f32 %v41, %v99
    %s108 = sld [smem:[#allocation3 + $0x80]]
    %v109 = vstv %s108
    %v110 = vmul.f32 %v42, %v109
    %v111 = vmul.f32 %v43, %v109
    %v112 = vmul.f32 %v44, %v109
    %v113 = vmul.f32 %v45, %v109
    %v114 = vmul.f32 %v46, %v109
    %v115 = vmul.f32 %v47, %v109
    %v116 = vmul.f32 %v48, %v109
    %v117 = vmul.f32 %v49, %v109
    %v118 = vadd.f32 %v100, %v110
    %v119 = vadd.f32 %v101, %v111
    %v120 = vadd.f32 %v102, %v112
    %v121 = vadd.f32 %v103, %v113
    %v122 = vadd.f32 %v104, %v114
    %v123 = vadd.f32 %v105, %v115
    %v124 = vadd.f32 %v106, %v116
    %v125 = vadd.f32 %v107, %v117
    %s126 = sld [smem:[#allocation3 + $0x100]]
    %v127 = vstv %s126
    %v128 = vmul.f32 %v50, %v127
    %v129 = vmul.f32 %v51, %v127
    %v130 = vmul.f32 %v52, %v127
    %v131 = vmul.f32 %v53, %v127
    %v132 = vmul.f32 %v54, %v127
    %v133 = vmul.f32 %v55, %v127
    %v134 = vmul.f32 %v56, %v127
    %v135 = vmul.f32 %v57, %v127
    %v136 = vadd.f32 %v118, %v128
    %v137 = vadd.f32 %v119, %v129
    %v138 = vadd.f32 %v120, %v130
    %v139 = vadd.f32 %v121, %v131
    %v140 = vadd.f32 %v122, %v132
    %v141 = vadd.f32 %v123, %v133
    %v142 = vadd.f32 %v124, %v134
    %v143 = vadd.f32 %v125, %v135
    %s144 = sld [smem:[#allocation3 + $0x180]]
    %v145 = vstv %s144
    %v146 = vmul.f32 %v58, %v145
    %v147 = vmul.f32 %v59, %v145
    %v148 = vmul.f32 %v60, %v145
    %v149 = vmul.f32 %v61, %v145
    %v150 = vmul.f32 %v62, %v145
    %v151 = vmul.f32 %v63, %v145
    %v152 = vmul.f32 %v64, %v145
    %v153 = vmul.f32 %v65, %v145
    %v154 = vadd.f32 %v136, %v146
    %v155 = vadd.f32 %v137, %v147
    %v156 = vadd.f32 %v138, %v148
    %v157 = vadd.f32 %v139, %v149
    %v158 = vadd.f32 %v140, %v150
    %v159 = vadd.f32 %v141, %v151
    %v160 = vadd.f32 %v142, %v152
    %v161 = vadd.f32 %v143, %v153
    %s162 = sld [smem:[#allocation3 + $0x200]]
    %v163 = vstv %s162
    %v164 = vmul.f32 %v66, %v163
    %v165 = vmul.f32 %v67, %v163
    %v166 = vmul.f32 %v68, %v163
    %v167 = vmul.f32 %v69, %v163
    %v168 = vmul.f32 %v70, %v163
    %v169 = vmul.f32 %v71, %v163
    %v170 = vmul.f32 %v72, %v163
    %v171 = vmul.f32 %v73, %v163
    %v172 = vadd.f32 %v154, %v164
    %v173 = vadd.f32 %v155, %v165
    %v174 = vadd.f32 %v156, %v166
    %v175 = vadd.f32 %v157, %v167
    %v176 = vadd.f32 %v158, %v168
    %v177 = vadd.f32 %v159, %v169
    %v178 = vadd.f32 %v160, %v170
    %v179 = vadd.f32 %v161, %v171
    %s180 = sld [smem:[#allocation3 + $0x280]]
    %v181 = vstv %s180
    %v182 = vmul.f32 %v74, %v181
    %v183 = vmul.f32 %v75, %v181
    %v184 = vmul.f32 %v76, %v181
    %v185 = vmul.f32 %v77, %v181
    %v186 = vmul.f32 %v78, %v181
    %v187 = vmul.f32 %v79, %v181
    %v188 = vmul.f32 %v80, %v181
    %v189 = vmul.f32 %v81, %v181
    %v190 = vadd.f32 %v172, %v182
    %v191 = vadd.f32 %v173, %v183
    %v192 = vadd.f32 %v174, %v184
    %v193 = vadd.f32 %v175, %v185
    %v194 = vadd.f32 %v176, %v186
    %v195 = vadd.f32 %v177, %v187
    %v196 = vadd.f32 %v178, %v188
    %v197 = vadd.f32 %v179, %v189
    %s198 = sld [smem:[#allocation3 + $0x300]]
    %v199 = vstv %s198
    %v200 = vmul.f32 %v82, %v199
    %v201 = vmul.f32 %v83, %v199
    %v202 = vmul.f32 %v84, %v199
    %v203 = vmul.f32 %v85, %v199
    %v204 = vmul.f32 %v86, %v199
    %v205 = vmul.f32 %v87, %v199
    %v206 = vmul.f32 %v88, %v199
    %v207 = vmul.f32 %v89, %v199
    %v208 = vadd.f32 %v190, %v200
    %v209 = vadd.f32 %v191, %v201
    %v210 = vadd.f32 %v192, %v202
    %v211 = vadd.f32 %v193, %v203
    %v212 = vadd.f32 %v194, %v204
    %v213 = vadd.f32 %v195, %v205
    %v214 = vadd.f32 %v196, %v206
    %v215 = vadd.f32 %v197, %v207
    %s216 = sld [smem:[#allocation3 + $0x380]]
    %v217 = vstv %s216
    %v218 = vmul.f32 %v90, %v217
    %v219 = vmul.f32 %v91, %v217
    %v220 = vmul.f32 %v92, %v217
    %v221 = vmul.f32 %v93, %v217
    %v222 = vmul.f32 %v94, %v217
    %v223 = vmul.f32 %v95, %v217
    %v224 = vmul.f32 %v96, %v217
    %v225 = vmul.f32 %v97, %v217
    %v226 = vadd.f32 %v208, %v218
    %v227 = vadd.f32 %v209, %v219
    %v228 = vadd.f32 %v210, %v220
    %v229 = vadd.f32 %v211, %v221
    %v230 = vadd.f32 %v212, %v222
    %v231 = vadd.f32 %v213, %v223
    %v232 = vadd.f32 %v214, %v224
    %v233 = vadd.f32 %v215, %v225
    %v242 = vrot.slane %v227, 7
    %vm243 = vcmask 1041409
    %v244 = vsel %vm243, %v242, %v226
    %v245 = vrot.slane %v228, 6
    %vm246 = vcmask 1042434
    %v247 = vsel %vm246, %v245, %v244
    %v248 = vrot.slane %v229, 5
    %vm249 = vcmask 1043459
    %v250 = vsel %vm249, %v248, %v247
    %v251 = vrot.slane %v230, 4
    %vm252 = vcmask 1044484
    %v253 = vsel %vm252, %v251, %v250
    %v254 = vrot.slane %v231, 3
    %vm255 = vcmask 1045509
    %v256 = vsel %vm255, %v254, %v253
    %v257 = vrot.slane %v232, 2
    %vm258 = vcmask 1046534
    %v259 = vsel %vm258, %v257, %v256
    %v260 = vrot.slane %v233, 1
    %vm261 = vcmask 1047559
    %v262 = vsel %vm261, %v260, %v259
    %vm264 = vcmask 523264
    %265 = vst.msk [vmem:[#allocation2] sm:$0xff] %vm264, %v262
    %s266 = sld [smem:[#allocation3 + $0x1]]
    %v267 = vstv %s266
    %v268 = vmul.f32 %v34, %v267
    %v269 = vmul.f32 %v35, %v267
    %v270 = vmul.f32 %v36, %v267
    %v271 = vmul.f32 %v37, %v267
    %v272 = vmul.f32 %v38, %v267
    %v273 = vmul.f32 %v39, %v267
    %v274 = vmul.f32 %v40, %v267
    %v275 = vmul.f32 %v41, %v267
    %s276 = sld [smem:[#allocation3 + $0x81]]
    %v277 = vstv %s276
    %v278 = vmul.f32 %v42, %v277
    %v279 = vmul.f32 %v43, %v277
    %v280 = vmul.f32 %v44, %v277
    %v281 = vmul.f32 %v45, %v277
    %v282 = vmul.f32 %v46, %v277
    %v283 = vmul.f32 %v47, %v277
    %v284 = vmul.f32 %v48, %v277
    %v285 = vmul.f32 %v49, %v277
    %v286 = vadd.f32 %v268, %v278
    %v287 = vadd.f32 %v269, %v279
    %v288 = vadd.f32 %v270, %v280
    %v289 = vadd.f32 %v271, %v281
    %v290 = vadd.f32 %v272, %v282
    %v291 = vadd.f32 %v273, %v283
    %v292 = vadd.f32 %v274, %v284
    %v293 = vadd.f32 %v275, %v285
    %s294 = sld [smem:[#allocation3 + $0x101]]
    %v295 = vstv %s294
    %v296 = vmul.f32 %v50, %v295
    %v297 = vmul.f32 %v51, %v295
    %v298 = vmul.f32 %v52, %v295
    %v299 = vmul.f32 %v53, %v295
    %v300 = vmul.f32 %v54, %v295
    %v301 = vmul.f32 %v55, %v295
    %v302 = vmul.f32 %v56, %v295
    %v303 = vmul.f32 %v57, %v295
    %v304 = vadd.f32 %v286, %v296
    %v305 = vadd.f32 %v287, %v297
    %v306 = vadd.f32 %v288, %v298
    %v307 = vadd.f32 %v289, %v299
    %v308 = vadd.f32 %v290, %v300
    %v309 = vadd.f32 %v291, %v301
    %v310 = vadd.f32 %v292, %v302
    %v311 = vadd.f32 %v293, %v303
    %s312 = sld [smem:[#allocation3 + $0x181]]
    %v313 = vstv %s312
    %v314 = vmul.f32 %v58, %v313
    %v315 = vmul.f32 %v59, %v313
    %v316 = vmul.f32 %v60, %v313
    %v317 = vmul.f32 %v61, %v313
    %v318 = vmul.f32 %v62, %v313
    %v319 = vmul.f32 %v63, %v313
    %v320 = vmul.f32 %v64, %v313
    %v321 = vmul.f32 %v65, %v313
    %v322 = vadd.f32 %v304, %v314
    %v323 = vadd.f32 %v305, %v315
    %v324 = vadd.f32 %v306, %v316
    %v325 = vadd.f32 %v307, %v317
    %v326 = vadd.f32 %v308, %v318
    %v327 = vadd.f32 %v309, %v319
    %v328 = vadd.f32 %v310, %v320
    %v329 = vadd.f32 %v311, %v321
    %s330 = sld [smem:[#allocation3 + $0x201]]
    %v331 = vstv %s330
    %v332 = vmul.f32 %v66, %v331
    %v333 = vmul.f32 %v67, %v331
    %v334 = vmul.f32 %v68, %v331
    %v335 = vmul.f32 %v69, %v331
    %v336 = vmul.f32 %v70, %v331
    %v337 = vmul.f32 %v71, %v331
    %v338 = vmul.f32 %v72, %v331
    %v339 = vmul.f32 %v73, %v331
    %v340 = vadd.f32 %v322, %v332
    %v341 = vadd.f32 %v323, %v333
    %v342 = vadd.f32 %v324, %v334
    %v343 = vadd.f32 %v325, %v335
    %v344 = vadd.f32 %v326, %v336
    %v345 = vadd.f32 %v327, %v337
    %v346 = vadd.f32 %v328, %v338
    %v347 = vadd.f32 %v329, %v339
    %s348 = sld [smem:[#allocation3 + $0x281]]
    %v349 = vstv %s348
    %v350 = vmul.f32 %v74, %v349
    %v351 = vmul.f32 %v75, %v349
    %v352 = vmul.f32 %v76, %v349
    %v353 = vmul.f32 %v77, %v349
    %v354 = vmul.f32 %v78, %v349
    %v355 = vmul.f32 %v79, %v349
    %v356 = vmul.f32 %v80, %v349
    %v357 = vmul.f32 %v81, %v349
    %v358 = vadd.f32 %v340, %v350
    %v359 = vadd.f32 %v341, %v351
    %v360 = vadd.f32 %v342, %v352
    %v361 = vadd.f32 %v343, %v353
    %v362 = vadd.f32 %v344, %v354
    %v363 = vadd.f32 %v345, %v355
    %v364 = vadd.f32 %v346, %v356
    %v365 = vadd.f32 %v347, %v357
    %s366 = sld [smem:[#allocation3 + $0x301]]
    %v367 = vstv %s366
    %v368 = vmul.f32 %v82, %v367
    %v369 = vmul.f32 %v83, %v367
    %v370 = vmul.f32 %v84, %v367
    %v371 = vmul.f32 %v85, %v367
    %v372 = vmul.f32 %v86, %v367
    %v373 = vmul.f32 %v87, %v367
    %v374 = vmul.f32 %v88, %v367
    %v375 = vmul.f32 %v89, %v367
    %v376 = vadd.f32 %v358, %v368
    %v377 = vadd.f32 %v359, %v369
    %v378 = vadd.f32 %v360, %v370
    %v379 = vadd.f32 %v361, %v371
    %v380 = vadd.f32 %v362, %v372
    %v381 = vadd.f32 %v363, %v373
    %v382 = vadd.f32 %v364, %v374
    %v383 = vadd.f32 %v365, %v375
    %s384 = sld [smem:[#allocation3 + $0x381]]
    %v385 = vstv %s384
    %v386 = vmul.f32 %v90, %v385
    %v387 = vmul.f32 %v91, %v385
    %v388 = vmul.f32 %v92, %v385
    %v389 = vmul.f32 %v93, %v385
    %v390 = vmul.f32 %v94, %v385
    %v391 = vmul.f32 %v95, %v385
    %v392 = vmul.f32 %v96, %v385
    %v393 = vmul.f32 %v97, %v385
    %v394 = vadd.f32 %v376, %v386
    %v395 = vadd.f32 %v377, %v387
    %v396 = vadd.f32 %v378, %v388
    %v397 = vadd.f32 %v379, %v389
    %v398 = vadd.f32 %v380, %v390
    %v399 = vadd.f32 %v381, %v391
    %v400 = vadd.f32 %v382, %v392
    %v401 = vadd.f32 %v383, %v393
    %v410 = vrot.slane %v395, 7
    %v411 = vsel %vm243, %v410, %v394
    %v412 = vrot.slane %v396, 6
    %v413 = vsel %vm246, %v412, %v411
    %v414 = vrot.slane %v397, 5
    %v415 = vsel %vm249, %v414, %v413
    %v416 = vrot.slane %v398, 4
    %v417 = vsel %vm252, %v416, %v415
    %v418 = vrot.slane %v399, 3
    %v419 = vsel %vm255, %v418, %v417
    %v420 = vrot.slane %v400, 2
    %v421 = vsel %vm258, %v420, %v419
    %v422 = vrot.slane %v401, 1
    %v423 = vsel %vm261, %v422, %v421
    %424 = vrot.lane.b32.xlu0 %v423, 64
    %v425 = vpop.permute.xlu0 %424
    %vm427 = vcmask 1048064
    %428 = vst.msk [vmem:[#allocation2] sm:$0xff] %vm427, %v425
    %s429 = sld [smem:[#allocation3 + $0x2]]
    %v430 = vstv %s429
    %v431 = vmul.f32 %v34, %v430
    %v432 = vmul.f32 %v35, %v430
    %v433 = vmul.f32 %v36, %v430
    %v434 = vmul.f32 %v37, %v430
    %v435 = vmul.f32 %v38, %v430
    %v436 = vmul.f32 %v39, %v430
    %v437 = vmul.f32 %v40, %v430
    %v438 = vmul.f32 %v41, %v430
    %s439 = sld [smem:[#allocation3 + $0x82]]
    %v440 = vstv %s439
    %v441 = vmul.f32 %v42, %v440
    %v442 = vmul.f32 %v43, %v440
    %v443 = vmul.f32 %v44, %v440
    %v444 = vmul.f32 %v45, %v440
    %v445 = vmul.f32 %v46, %v440
    %v446 = vmul.f32 %v47, %v440
    %v447 = vmul.f32 %v48, %v440
    %v448 = vmul.f32 %v49, %v440
    %v449 = vadd.f32 %v431, %v441
    %v450 = vadd.f32 %v432, %v442
    %v451 = vadd.f32 %v433, %v443
    %v452 = vadd.f32 %v434, %v444
    %v453 = vadd.f32 %v435, %v445
    %v454 = vadd.f32 %v436, %v446
    %v455 = vadd.f32 %v437, %v447
    %v456 = vadd.f32 %v438, %v448
    %s457 = sld [smem:[#allocation3 + $0x102]]
    %v458 = vstv %s457
    %v459 = vmul.f32 %v50, %v458
    %v460 = vmul.f32 %v51, %v458
    %v461 = vmul.f32 %v52, %v458
    %v462 = vmul.f32 %v53, %v458
    %v463 = vmul.f32 %v54, %v458
    %v464 = vmul.f32 %v55, %v458
    %v465 = vmul.f32 %v56, %v458
    %v466 = vmul.f32 %v57, %v458
    %v467 = vadd.f32 %v449, %v459
    %v468 = vadd.f32 %v450, %v460
    %v469 = vadd.f32 %v451, %v461
    %v470 = vadd.f32 %v452, %v462
    %v471 = vadd.f32 %v453, %v463
    %v472 = vadd.f32 %v454, %v464
    %v473 = vadd.f32 %v455, %v465
    %v474 = vadd.f32 %v456, %v466
    %s475 = sld [smem:[#allocation3 + $0x182]]
    %v476 = vstv %s475
    %v477 = vmul.f32 %v58, %v476
    %v478 = vmul.f32 %v59, %v476
    %v479 = vmul.f32 %v60, %v476
    %v480 = vmul.f32 %v61, %v476
    %v481 = vmul.f32 %v62, %v476
    %v482 = vmul.f32 %v63, %v476
    %v483 = vmul.f32 %v64, %v476
    %v484 = vmul.f32 %v65, %v476
    %v485 = vadd.f32 %v467, %v477
    %v486 = vadd.f32 %v468, %v478
    %v487 = vadd.f32 %v469, %v479
    %v488 = vadd.f32 %v470, %v480
    %v489 = vadd.f32 %v471, %v481
    %v490 = vadd.f32 %v472, %v482
    %v491 = vadd.f32 %v473, %v483
    %v492 = vadd.f32 %v474, %v484
    %s493 = sld [smem:[#allocation3 + $0x202]]
    %v494 = vstv %s493
    %v495 = vmul.f32 %v66, %v494
    %v496 = vmul.f32 %v67, %v494
    %v497 = vmul.f32 %v68, %v494
    %v498 = vmul.f32 %v69, %v494
    %v499 = vmul.f32 %v70, %v494
    %v500 = vmul.f32 %v71, %v494
    %v501 = vmul.f32 %v72, %v494
    %v502 = vmul.f32 %v73, %v494
    %v503 = vadd.f32 %v485, %v495
    %v504 = vadd.f32 %v486, %v496
    %v505 = vadd.f32 %v487, %v497
    %v506 = vadd.f32 %v488, %v498
    %v507 = vadd.f32 %v489, %v499
    %v508 = vadd.f32 %v490, %v500
    %v509 = vadd.f32 %v491, %v501
    %v510 = vadd.f32 %v492, %v502
    %s511 = sld [smem:[#allocation3 + $0x282]]
    %v512 = vstv %s511
    %v513 = vmul.f32 %v74, %v512
    %v514 = vmul.f32 %v75, %v512
    %v515 = vmul.f32 %v76, %v512
    %v516 = vmul.f32 %v77, %v512
    %v517 = vmul.f32 %v78, %v512
    %v518 = vmul.f32 %v79, %v512
    %v519 = vmul.f32 %v80, %v512
    %v520 = vmul.f32 %v81, %v512
    %v521 = vadd.f32 %v503, %v513
    %v522 = vadd.f32 %v504, %v514
    %v523 = vadd.f32 %v505, %v515
    %v524 = vadd.f32 %v506, %v516
    %v525 = vadd.f32 %v507, %v517
    %v526 = vadd.f32 %v508, %v518
    %v527 = vadd.f32 %v509, %v519
    %v528 = vadd.f32 %v510, %v520
    %s529 = sld [smem:[#allocation3 + $0x302]]
    %v530 = vstv %s529
    %v531 = vmul.f32 %v82, %v530
    %v532 = vmul.f32 %v83, %v530
    %v533 = vmul.f32 %v84, %v530
    %v534 = vmul.f32 %v85, %v530
    %v535 = vmul.f32 %v86, %v530
    %v536 = vmul.f32 %v87, %v530
    %v537 = vmul.f32 %v88, %v530
    %v538 = vmul.f32 %v89, %v530
    %v539 = vadd.f32 %v521, %v531
    %v540 = vadd.f32 %v522, %v532
    %v541 = vadd.f32 %v523, %v533
    %v542 = vadd.f32 %v524, %v534
    %v543 = vadd.f32 %v525, %v535
    %v544 = vadd.f32 %v526, %v536
    %v545 = vadd.f32 %v527, %v537
    %v546 = vadd.f32 %v528, %v538
    %s547 = sld [smem:[#allocation3 + $0x382]]
    %v548 = vstv %s547
    %v549 = vmul.f32 %v90, %v548
    %v550 = vmul.f32 %v91, %v548
    %v551 = vmul.f32 %v92, %v548
    %v552 = vmul.f32 %v93, %v548
    %v553 = vmul.f32 %v94, %v548
    %v554 = vmul.f32 %v95, %v548
    %v555 = vmul.f32 %v96, %v548
    %v556 = vmul.f32 %v97, %v548
    %v557 = vadd.f32 %v539, %v549
    %v558 = vadd.f32 %v540, %v550
    %v559 = vadd.f32 %v541, %v551
    %v560 = vadd.f32 %v542, %v552
    %v561 = vadd.f32 %v543, %v553
    %v562 = vadd.f32 %v544, %v554
    %v563 = vadd.f32 %v545, %v555
    %v564 = vadd.f32 %v546, %v556
    %v573 = vrot.slane %v558, 7
    %v574 = vsel %vm243, %v573, %v557
    %v575 = vrot.slane %v559, 6
    %v576 = vsel %vm246, %v575, %v574
    %v577 = vrot.slane %v560, 5
    %v578 = vsel %vm249, %v577, %v576
    %v579 = vrot.slane %v561, 4
    %v580 = vsel %vm252, %v579, %v578
    %v581 = vrot.slane %v562, 3
    %v582 = vsel %vm255, %v581, %v580
    %v583 = vrot.slane %v563, 2
    %v584 = vsel %vm258, %v583, %v582
    %v585 = vrot.slane %v564, 1
    %v586 = vsel %vm261, %v585, %v584
    %588 = vst.msk [vmem:[#allocation2 + $0x8] sm:$0xff] %vm264, %v586
    %s589 = sld [smem:[#allocation3 + $0x3]]
    %v590 = vstv %s589
    %v591 = vmul.f32 %v34, %v590
    %v592 = vmul.f32 %v35, %v590
    %v593 = vmul.f32 %v36, %v590
    %v594 = vmul.f32 %v37, %v590
    %v595 = vmul.f32 %v38, %v590
    %v596 = vmul.f32 %v39, %v590
    %v597 = vmul.f32 %v40, %v590
    %v598 = vmul.f32 %v41, %v590
    %s599 = sld [smem:[#allocation3 + $0x83]]
    %v600 = vstv %s599
    %v601 = vmul.f32 %v42, %v600
    %v602 = vmul.f32 %v43, %v600
    %v603 = vmul.f32 %v44, %v600
    %v604 = vmul.f32 %v45, %v600
    %v605 = vmul.f32 %v46, %v600
    %v606 = vmul.f32 %v47, %v600
    %v607 = vmul.f32 %v48, %v600
    %v608 = vmul.f32 %v49, %v600
    %v609 = vadd.f32 %v591, %v601
    %v610 = vadd.f32 %v592, %v602
    %v611 = vadd.f32 %v593, %v603
    %v612 = vadd.f32 %v594, %v604
    %v613 = vadd.f32 %v595, %v605
    %v614 = vadd.f32 %v596, %v606
    %v615 = vadd.f32 %v597, %v607
    %v616 = vadd.f32 %v598, %v608
    %s617 = sld [smem:[#allocation3 + $0x103]]
    %v618 = vstv %s617
    %v619 = vmul.f32 %v50, %v618
    %v620 = vmul.f32 %v51, %v618
    %v621 = vmul.f32 %v52, %v618
    %v622 = vmul.f32 %v53, %v618
    %v623 = vmul.f32 %v54, %v618
    %v624 = vmul.f32 %v55, %v618
    %v625 = vmul.f32 %v56, %v618
    %v626 = vmul.f32 %v57, %v618
    %v627 = vadd.f32 %v609, %v619
    %v628 = vadd.f32 %v610, %v620
    %v629 = vadd.f32 %v611, %v621
    %v630 = vadd.f32 %v612, %v622
    %v631 = vadd.f32 %v613, %v623
    %v632 = vadd.f32 %v614, %v624
    %v633 = vadd.f32 %v615, %v625
    %v634 = vadd.f32 %v616, %v626
    %s635 = sld [smem:[#allocation3 + $0x183]]
    %v636 = vstv %s635
    %v637 = vmul.f32 %v58, %v636
    %v638 = vmul.f32 %v59, %v636
    %v639 = vmul.f32 %v60, %v636
    %v640 = vmul.f32 %v61, %v636
    %v641 = vmul.f32 %v62, %v636
    %v642 = vmul.f32 %v63, %v636
    %v643 = vmul.f32 %v64, %v636
    %v644 = vmul.f32 %v65, %v636
    %v645 = vadd.f32 %v627, %v637
    %v646 = vadd.f32 %v628, %v638
    %v647 = vadd.f32 %v629, %v639
    %v648 = vadd.f32 %v630, %v640
    %v649 = vadd.f32 %v631, %v641
    %v650 = vadd.f32 %v632, %v642
    %v651 = vadd.f32 %v633, %v643
    %v652 = vadd.f32 %v634, %v644
    %s653 = sld [smem:[#allocation3 + $0x203]]
    %v654 = vstv %s653
    %v655 = vmul.f32 %v66, %v654
    %v656 = vmul.f32 %v67, %v654
    %v657 = vmul.f32 %v68, %v654
    %v658 = vmul.f32 %v69, %v654
    %v659 = vmul.f32 %v70, %v654
    %v660 = vmul.f32 %v71, %v654
    %v661 = vmul.f32 %v72, %v654
    %v662 = vmul.f32 %v73, %v654
    %v663 = vadd.f32 %v645, %v655
    %v664 = vadd.f32 %v646, %v656
    %v665 = vadd.f32 %v647, %v657
    %v666 = vadd.f32 %v648, %v658
    %v667 = vadd.f32 %v649, %v659
    %v668 = vadd.f32 %v650, %v660
    %v669 = vadd.f32 %v651, %v661
    %v670 = vadd.f32 %v652, %v662
    %s671 = sld [smem:[#allocation3 + $0x283]]
    %v672 = vstv %s671
    %v673 = vmul.f32 %v74, %v672
    %v674 = vmul.f32 %v75, %v672
    %v675 = vmul.f32 %v76, %v672
    %v676 = vmul.f32 %v77, %v672
    %v677 = vmul.f32 %v78, %v672
    %v678 = vmul.f32 %v79, %v672
    %v679 = vmul.f32 %v80, %v672
    %v680 = vmul.f32 %v81, %v672
    %v681 = vadd.f32 %v663, %v673
    %v682 = vadd.f32 %v664, %v674
    %v683 = vadd.f32 %v665, %v675
    %v684 = vadd.f32 %v666, %v676
    %v685 = vadd.f32 %v667, %v677
    %v686 = vadd.f32 %v668, %v678
    %v687 = vadd.f32 %v669, %v679
    %v688 = vadd.f32 %v670, %v680
    %s689 = sld [smem:[#allocation3 + $0x303]]
    %v690 = vstv %s689
    %v691 = vmul.f32 %v82, %v690
    %v692 = vmul.f32 %v83, %v690
    %v693 = vmul.f32 %v84, %v690
    %v694 = vmul.f32 %v85, %v690
    %v695 = vmul.f32 %v86, %v690
    %v696 = vmul.f32 %v87, %v690
    %v697 = vmul.f32 %v88, %v690
    %v698 = vmul.f32 %v89, %v690
    %v699 = vadd.f32 %v681, %v691
    %v700 = vadd.f32 %v682, %v692
    %v701 = vadd.f32 %v683, %v693
    %v702 = vadd.f32 %v684, %v694
    %v703 = vadd.f32 %v685, %v695
    %v704 = vadd.f32 %v686, %v696
    %v705 = vadd.f32 %v687, %v697
    %v706 = vadd.f32 %v688, %v698
    %s707 = sld [smem:[#allocation3 + $0x383]]
    %v708 = vstv %s707
    %v709 = vmul.f32 %v90, %v708
    %v710 = vmul.f32 %v91, %v708
    %v711 = vmul.f32 %v92, %v708
    %v712 = vmul.f32 %v93, %v708
    %v713 = vmul.f32 %v94, %v708
    %v714 = vmul.f32 %v95, %v708
    %v715 = vmul.f32 %v96, %v708
    %v716 = vmul.f32 %v97, %v708
    %v717 = vadd.f32 %v699, %v709
    %v718 = vadd.f32 %v700, %v710
    %v719 = vadd.f32 %v701, %v711
    %v720 = vadd.f32 %v702, %v712
    %v721 = vadd.f32 %v703, %v713
    %v722 = vadd.f32 %v704, %v714
    %v723 = vadd.f32 %v705, %v715
    %v724 = vadd.f32 %v706, %v716
    %v733 = vrot.slane %v718, 7
    %v734 = vsel %vm243, %v733, %v717
    %v735 = vrot.slane %v719, 6
    %v736 = vsel %vm246, %v735, %v734
    %v737 = vrot.slane %v720, 5
    %v738 = vsel %vm249, %v737, %v736
    %v739 = vrot.slane %v721, 4
    %v740 = vsel %vm252, %v739, %v738
    %v741 = vrot.slane %v722, 3
    %v742 = vsel %vm255, %v741, %v740
    %v743 = vrot.slane %v723, 2
    %v744 = vsel %vm258, %v743, %v742
    %v745 = vrot.slane %v724, 1
    %v746 = vsel %vm261, %v745, %v744
    %747 = vrot.lane.b32.xlu0 %v746, 64
    %v748 = vpop.permute.xlu0 %747
    %750 = vst.msk [vmem:[#allocation2 + $0x8] sm:$0xff] %vm427, %v748
    %v751 = vld [vmem:[#allocation2] sm:$0xff]
    %v752 = vld [vmem:[#allocation2 + $0x8] sm:$0xff]
    %v753 = vld [vmem:[%s2] sm:$0xff]
    %v754 = vld [vmem:[%s2 + $0x8] sm:$0xff]
    %v755 = vld [vmem:[%s2 + $0x10] sm:$0xff]
    %v756 = vld [vmem:[%s2 + $0x18] sm:$0xff]
    %v757 = vld [vmem:[%s2 + $0x20] sm:$0xff]
    %v758 = vld [vmem:[%s2 + $0x28] sm:$0xff]
    %v759 = vld [vmem:[%s2 + $0x30] sm:$0xff]
    %v760 = vld [vmem:[%s2 + $0x38] sm:$0xff]
    %v761 = vld [vmem:[%s2 + $0x40] sm:$0xff]
    %v762 = vld [vmem:[%s2 + $0x48] sm:$0xff]
    %v763 = vld [vmem:[%s2 + $0x50] sm:$0xff]
    %v764 = vld [vmem:[%s2 + $0x58] sm:$0xff]
    %v765 = vld [vmem:[%s2 + $0x60] sm:$0xff]
    %v766 = vld [vmem:[%s2 + $0x68] sm:$0xff]
    %v767 = vld [vmem:[%s2 + $0x70] sm:$0xff]
    %v768 = vld [vmem:[%s2 + $0x78] sm:$0xff]
    %v769 = vld [vmem:[%s2 + $0x80] sm:$0xff]
    %v770 = vld [vmem:[%s2 + $0x88] sm:$0xff]
    %v771 = vld [vmem:[%s2 + $0x90] sm:$0xff]
    %v772 = vld [vmem:[%s2 + $0x98] sm:$0xff]
    %v773 = vld [vmem:[%s2 + $0xa0] sm:$0xff]
    %v774 = vld [vmem:[%s2 + $0xa8] sm:$0xff]
    %v775 = vld [vmem:[%s2 + $0xb0] sm:$0xff]
    %v776 = vld [vmem:[%s2 + $0xb8] sm:$0xff]
    %v777 = vld [vmem:[%s2 + $0xc0] sm:$0xff]
    %v778 = vld [vmem:[%s2 + $0xc8] sm:$0xff]
    %v779 = vld [vmem:[%s2 + $0xd0] sm:$0xff]
    %v780 = vld [vmem:[%s2 + $0xd8] sm:$0xff]
    %v781 = vld [vmem:[%s2 + $0xe0] sm:$0xff]
    %v782 = vld [vmem:[%s2 + $0xe8] sm:$0xff]
    %v783 = vld [vmem:[%s2 + $0xf0] sm:$0xff]
    %v784 = vld [vmem:[%s2 + $0xf8] sm:$0xff]
    %785 = vmatprep.subr.mxu0 0.0
    %786 = vmatpush1.msra.mxu0 %v753
    %787 = vmatprep.subr.mxu0 0.0
    %788 = vmatpush1.msra.mxu0 %v754
    %789 = vmatprep.subr.mxu0 0.0
    %790 = vmatpush1.msra.mxu0 %v755
    %791 = vmatprep.subr.mxu0 0.0
    %792 = vmatpush1.msra.mxu0 %v756
    %793 = vmatprep.subr.mxu0 0.0
    %794 = vmatpush1.msra.mxu0 %v757
    %795 = vmatprep.subr.mxu0 0.0
    %796 = vmatpush1.msra.mxu0 %v758
    %797 = vmatprep.subr.mxu0 0.0
    %798 = vmatpush1.msra.mxu0 %v759
    %799 = vmatprep.subr.mxu0 0.0
    %800 = vmatpush1.msra.mxu0 %v760
    %801 = vmatprep.subr.mxu0 0.0
    %802 = vmatpush1.msra.mxu0 %v761
    %803 = vmatprep.subr.mxu0 0.0
    %804 = vmatpush1.msra.mxu0 %v762
    %805 = vmatprep.subr.mxu0 0.0
    %806 = vmatpush1.msra.mxu0 %v763
    %807 = vmatprep.subr.mxu0 0.0
    %808 = vmatpush1.msra.mxu0 %v764
    %809 = vmatprep.subr.mxu0 0.0
    %810 = vmatpush1.msra.mxu0 %v765
    %811 = vmatprep.subr.mxu0 0.0
    %812 = vmatpush1.msra.mxu0 %v766
    %813 = vmatprep.subr.mxu0 0.0
    %814 = vmatpush1.msra.mxu0 %v767
    %815 = vmatprep.subr.mxu0 0.0
    %816 = vmatpush1.msra.mxu0 %v768
    %817 = vmatprep.subr.mxu0 0.0
    %818 = vmatpush1.msra.mxu0 %v769
    %819 = vmatprep.subr.mxu0 0.0
    %820 = vmatpush1.msra.mxu0 %v770
    %821 = vmatprep.subr.mxu0 0.0
    %822 = vmatpush1.msra.mxu0 %v771
    %823 = vmatprep.subr.mxu0 0.0
    %824 = vmatpush1.msra.mxu0 %v772
    %825 = vmatprep.subr.mxu0 0.0
    %826 = vmatpush1.msra.mxu0 %v773
    %827 = vmatprep.subr.mxu0 0.0
    %828 = vmatpush1.msra.mxu0 %v774
    %829 = vmatprep.subr.mxu0 0.0
    %830 = vmatpush1.msra.mxu0 %v775
    %831 = vmatprep.subr.mxu0 0.0
    %832 = vmatpush1.msra.mxu0 %v776
    %833 = vmatprep.subr.mxu0 0.0
    %834 = vmatpush1.msra.mxu0 %v777
    %835 = vmatprep.subr.mxu0 0.0
    %836 = vmatpush1.msra.mxu0 %v778
    %837 = vmatprep.subr.mxu0 0.0
    %838 = vmatpush1.msra.mxu0 %v779
    %839 = vmatprep.subr.mxu0 0.0
    %840 = vmatpush1.msra.mxu0 %v780
    %841 = vmatprep.subr.mxu0 0.0
    %842 = vmatpush1.msra.mxu0 %v781
    %843 = vmatprep.subr.mxu0 0.0
    %844 = vmatpush1.msra.mxu0 %v782
    %845 = vmatprep.subr.mxu0 0.0
    %846 = vmatpush1.msra.mxu0 %v783
    %847 = vmatprep.subr.mxu0 0.0
    %848 = vmatpush1.msra.mxu0 %v784
    %849 = vmatprep.mubr.f32.mxu0 %v752
    %850 = vmatmul.mubr.f32.gmra.mrb[0].mxu0 %v751
    %v851 = vpop.f32.mrb[0].mxu0
    %v852 = vadd.f32 0.0, %v851
    %v853 = vpop.f32.mrb[0].mxu0
    %854 = vdwg.mxu0
    %v855 = vld [vmem:[%s3] sm:$0x1]
    %v856 = vld [vmem:[%s3 + $0x1] sm:$0x1]
    %vm857 = vcmask 31744
    %v858 = vsel %vm857, %v852, 0.0
    %v859 = vrot.slane %v858, 4
    %v860 = vadd.f32 %v858, %v859
    %v861 = vrot.slane %v860, 2
    %v862 = vadd.f32 %v860, %v861
    %v863 = vrot.slane %v862, 1
    %v864 = vadd.f32 %v862, %v863
    %v865 = vrcp.pop 8.0
    %v866 = vmul.f32 %v864, %v865
    %v867 = vsub.f32 %v852, %v866
    %v868 = vmul.f32 %v867, %v867
    %v869 = vsel %vm857, %v868, 0.0
    %v870 = vrot.slane %v869, 4
    %v871 = vadd.f32 %v869, %v870
    %v872 = vrot.slane %v871, 2
    %v873 = vadd.f32 %v871, %v872
    %v874 = vrot.slane %v873, 1
    %v875 = vadd.f32 %v873, %v874
    %v876 = vmul.f32 %v875, %v865
    %v877 = vlaneseq
    %v878 = vshrl.u32 %v877, 7
    %v879 = vsub.s32 0, %v878
    %v880 = vrot.slane %v855, %v879
    %v881 = vmul.f32 %v880, %v867
    %v882 = vadd.f32 %v876, 1e-05
    %v883 = vrsqrt.pop %v882
    %v884 = vmul.f32 %v881, %v883
    %v885 = vlaneseq
    %v886 = vshrl.u32 %v885, 7
    %v887 = vsub.s32 0, %v886
    %v888 = vrot.slane %v856, %v887
    %v889 = vadd.f32 %v884, %v888
    %v890 = vld [vmem:[%s4] sm:$0xf]
    %v892 = vsel %vm857, %v889, 0
    %vm894 = vcmask 1043456
    %v896 = vsel %vm894, %v890, 0
    %898 = vmatprep.subr.mxu0 0.0
    %899 = vmatpush1.msra.mxu0 %v896
    %900 = vmatprep.subr.mxu0 0.0
    %901 = vmatpush1.msra.mxu0 0.0
    %902 = vmatprep.subr.mxu0 0.0
    %903 = vmatpush1.msra.mxu0 0.0
    %904 = vmatprep.subr.mxu0 0.0
    %905 = vmatpush1.msra.mxu0 0.0
    %906 = vmatprep.subr.mxu0 0.0
    %907 = vmatpush1.msra.mxu0 0.0
    %908 = vmatprep.subr.mxu0 0.0
    %909 = vmatpush1.msra.mxu0 0.0
    %910 = vmatprep.subr.mxu0 0.0
    %911 = vmatpush1.msra.mxu0 0.0
    %912 = vmatprep.subr.mxu0 0.0
    %913 = vmatpush1.msra.mxu0 0.0
    %914 = vmatprep.subr.mxu0 0.0
    %915 = vmatpush1.msra.mxu0 0.0
    %916 = vmatprep.subr.mxu0 0.0
    %917 = vmatpush1.msra.mxu0 0.0
    %918 = vmatprep.subr.mxu0 0.0
    %919 = vmatpush1.msra.mxu0 0.0
    %920 = vmatprep.subr.mxu0 0.0
    %921 = vmatpush1.msra.mxu0 0.0
    %922 = vmatprep.subr.mxu0 0.0
    %923 = vmatpush1.msra.mxu0 0.0
    %924 = vmatprep.subr.mxu0 0.0
    %925 = vmatpush1.msra.mxu0 0.0
    %926 = vmatprep.subr.mxu0 0.0
    %927 = vmatpush1.msra.mxu0 0.0
    %928 = vmatprep.subr.mxu0 0.0
    %929 = vmatpush1.msra.mxu0 0.0
    %930 = vmatprep.subr.mxu0 0.0
    %931 = vmatpush1.msra.mxu0 0.0
    %932 = vmatprep.subr.mxu0 0.0
    %933 = vmatpush1.msra.mxu0 0.0
    %934 = vmatprep.subr.mxu0 0.0
    %935 = vmatpush1.msra.mxu0 0.0
    %936 = vmatprep.subr.mxu0 0.0
    %937 = vmatpush1.msra.mxu0 0.0
    %938 = vmatprep.subr.mxu0 0.0
    %939 = vmatpush1.msra.mxu0 0.0
    %940 = vmatprep.subr.mxu0 0.0
    %941 = vmatpush1.msra.mxu0 0.0
    %942 = vmatprep.subr.mxu0 0.0
    %943 = vmatpush1.msra.mxu0 0.0
    %944 = vmatprep.subr.mxu0 0.0
    %945 = vmatpush1.msra.mxu0 0.0
    %946 = vmatprep.subr.mxu0 0.0
    %947 = vmatpush1.msra.mxu0 0.0
    %948 = vmatprep.subr.mxu0 0.0
    %949 = vmatpush1.msra.mxu0 0.0
    %950 = vmatprep.subr.mxu0 0.0
    %951 = vmatpush1.msra.mxu0 0.0
    %952 = vmatprep.subr.mxu0 0.0
    %953 = vmatpush1.msra.mxu0 0.0
    %954 = vmatprep.subr.mxu0 0.0
    %955 = vmatpush1.msra.mxu0 0.0
    %956 = vmatprep.subr.mxu0 0.0
    %957 = vmatpush1.msra.mxu0 0.0
    %958 = vmatprep.subr.mxu0 0.0
    %959 = vmatpush1.msra.mxu0 0.0
    %960 = vmatprep.subr.mxu0 0.0
    %961 = vmatpush1.msra.mxu0 0.0
    %962 = vmatprep.mubr.f32.mxu0 0.0
    %963 = vmatmul.mubr.f32.gmra.mrb[0].mxu0 %v892
    %v964 = vpop.f32.mrb[0].mxu0
    %v965 = vadd.f32 0.0, %v964
    %v966 = vpop.f32.mrb[0].mxu0
    %967 = vdwg.mxu0
    %vm968 = vcmask 64512
    %969 = vst.msk [vmem:[#allocation6] sm:$0xff] %vm968, %v965
    // Predicated region
    $region26: #{tpu_custom_call.1} parent=1 // pred_check
      _
    $region27: #{tpu_custom_call.1} parent=1 // pred_check_branch
      %971 = sbr.rel (0) target = $region29
    $region28: #{tpu_custom_call.1} parent=1 // pred_region
      %s973 = ssub.s32 128, 128
      %974 = vsyncadd [#allocation4], %s973
      %s976 = sshll.u32 [#allocation6], 4
      %s977 = int_to_ptr.vmem [resolvable:$true] %s976
      %979 = dma.vmem_to_hbm [thread:$0]  %s977, 128, %s5, [#allocation4]
    $region29: #{tpu_custom_call.1} parent=1 // pred_fallthru
      _
    // Predicated region
    $region30: #{tpu_custom_call.1} parent=1 // pred_check
      _
    $region31: #{tpu_custom_call.1} parent=1 // pred_check_branch
      %981 = sbr.rel (0) target = $region33
    $region32: #{tpu_custom_call.1} parent=1 // pred_region
      %982 = dma.done [#allocation4], 128
    $region33: #{tpu_custom_call.1} parent=1 // pred_fallthru
      _
    %983 = vsyncpa [#allocation4], 1
    %984 = vsyncpa [#allocation5], 1

</llo_original>
